<compile_context>
chip_gen: v5e
topology: v5e:2x2
jax: 0.10.0
libtpu: 0.0.40
codegen_flags: <defaults>
</compile_context>

<pallas_src>
import functools

import jax
import jax.numpy as jnp
from jax import lax
from jax.experimental import pallas as pl
from jax.experimental.pallas import tpu as pltpu

_LANE = 128
_MAX_W = 512    # lanes per tile row
_MAX_TM = 512   # sublane rows per tile (512x512 f32 = 1 MiB per input block)


def _round_up(x, m):
    return (x + m - 1) // m * m


def _make_iou_loss_kernel(reduction: str, eps: float, tm: int, W: int,
                          total4: int):
    def kernel(p_ref, t_ref, out_ref):
        # Interleaved tiles: lane l of global row r holds coordinate (l % 4)
        # of box (r * W + l) // 4.  Results below are only meaningful at the
        # "x1 lanes" (l % 4 == 0); other lanes are masked / ignored.
        a = p_ref[...].astype(jnp.float32)    # (tm, W)
        b = t_ref[...].astype(jnp.float32)

        # Circular lane rotations (per row): roll by W-k == shift by -k, i.e.
        # the value at lane l comes from lane l+k.
        a2 = pltpu.roll(a, W - 2, axis=1)     # lane l -> a[l+2] (x2 / y2)
        b2 = pltpu.roll(b, W - 2, axis=1)

        da = a2 - a                           # l: pred width, l+1: pred height
        db = b2 - b
        pred_area = da * pltpu.roll(da, W - 1, axis=1)
        tgt_area = db * pltpu.roll(db, W - 1, axis=1)

        # Intersection extents (rb - lt, clamped at 0): l -> x, l+1 -> y.
        ov = jnp.maximum(jnp.minimum(a2, b2) - jnp.maximum(a, b), 0.0)
        inter = ov * pltpu.roll(ov, W - 1, axis=1)

        union = pred_area + tgt_area - inter
        # Exact divide (not approx reciprocal): kernel is HBM-bound, and this
        # keeps bit-close agreement with the PyTorch reference.
        loss = 1.0 - inter / (union + eps)    # valid at lanes l % 4 == 0

        if reduction == 'none':
            out_ref[...] = loss               # wrapper keeps every 4th element
        else:
            c = pl.program_id(0)              # core split ('parallel')
            i = pl.program_id(1)              # sequential tiles ('arbitrary')
            blk = c * pl.num_programs(1) + i  # un-clamped global block index
            row = lax.broadcasted_iota(jnp.int32, (tm, W), 0)
            lane = lax.broadcasted_iota(jnp.int32, (tm, W), 1)
            flat = (blk * tm + row) * W + lane
            valid = ((lane & 3) == 0) & (flat < total4)
            masked = jnp.where(valid, loss, 0.0)

            @pl.when(i == 0)
            def _():
                out_ref[...] = jnp.zeros_like(out_ref)

            # Scalar partial broadcast-added into the (1, 8, 128) accumulator
            # block; the wrapper only reads element [c, 0, 0].
            out_ref[...] += jnp.sum(masked)

    return kernel


@functools.partial(jax.jit, static_argnames=('reduction', 'eps'))
def iou_loss(pred, target, reduction='mean', eps=1e-07):
    """Pallas IoU loss.  pred/target: [B, N, 4] boxes in (x1, y1, x2, y2)."""
    assert reduction in ('mean', 'sum', 'none')
    assert pred.shape == target.shape and pred.shape[-1] == 4
    B, N, _ = pred.shape

    # Keep bf16 inputs bf16 in HBM (cast in-kernel); anything else -> f32.
    if pred.dtype not in (jnp.float32, jnp.bfloat16):
        pred = pred.astype(jnp.float32)
    if target.dtype not in (jnp.float32, jnp.bfloat16):
        target = target.astype(jnp.float32)

    total = B * N
    total4 = 4 * total
    assert total4 < 2 ** 31 - (1 << 22), 'int32 flat index would overflow'

    # Lane-dense interleaved view [rows, W].  Free reshape when W | 4*B*N;
    # otherwise zero-pad the flat tail (one extra HBM pass over the inputs).
    # TODO(synk): have upstream producers emit B*N as a multiple of 32 so the
    # pad-free path always triggers.
    W = 0
    for cand in (_MAX_W, 256, _LANE):
        if total4 % cand == 0:
            W = cand
            break
    if W:
        padded_len = total4
    else:
        W = min(_MAX_W, _round_up(total4, _LANE))
        padded_len = _round_up(total4, W)

    rows = padded_len // W
    tm = min(_MAX_TM, (rows // 8) * 8) if rows >= 8 else rows
    nblocks = pl.cdiv(rows, tm)

    def as_view(x):
        flat = x.reshape(-1)
        if padded_len != total4:
            flat = jnp.pad(flat, (0, padded_len - total4))
        return flat.reshape(rows, W)

    pred_v = as_view(pred)
    tgt_v = as_view(target)

    kernel = _make_iou_loss_kernel(reduction, eps, tm, W, total4)

    if reduction == 'none':
        grid = (nblocks,)
        in_specs = [pl.BlockSpec((tm, W), lambda i: (i, 0)),
                    pl.BlockSpec((tm, W), lambda i: (i, 0))]
        out_specs = pl.BlockSpec((tm, W), lambda i: (i, 0))
        out_shape = jax.ShapeDtypeStruct((rows, W), jnp.float32)
        dim_sem = ('parallel',)
        out_bytes = rows * W * 4
    else:
        # Two partial sums ('parallel' over cores) so v7x uses both TCs; each
        # core owns one resident accumulator block across its 'arbitrary' axis.
        half = pl.cdiv(nblocks, 2)
        last = nblocks - 1

        def in_map(c, i):
            return (jnp.minimum(c * half + i, last), 0)

        grid = (2, half)
        in_specs = [pl.BlockSpec((tm, W), in_map),
                    pl.BlockSpec((tm, W), in_map)]
        out_specs = pl.BlockSpec((1, 8, 128), lambda c, i: (c, 0, 0))
        out_shape = jax.ShapeDtypeStruct((2, 8, 128), jnp.float32)
        dim_sem = ('parallel', 'arbitrary')
        out_bytes = 2 * 8 * 128 * 4

    cost = pl.CostEstimate(
        flops=30 * total,
        transcendentals=0,
        bytes_accessed=(pred_v.size * pred_v.dtype.itemsize
                        + tgt_v.size * tgt_v.dtype.itemsize + out_bytes))

    result = pl.pallas_call(
        kernel,
        out_shape=out_shape,
        grid_spec=pltpu.PrefetchScalarGridSpec(
            num_scalar_prefetch=0,
            grid=grid,
            in_specs=in_specs,
            out_specs=out_specs),
        compiler_params=pltpu.CompilerParams(
            dimension_semantics=dim_sem,
            vmem_limit_bytes=48 << 20),
        cost_estimate=cost,
    )(pred_v, tgt_v)

    if reduction == 'none':
        # Flat position 4*k of the output holds the loss of box k.
        return result.reshape(-1)[:total4:4].reshape(B, N)
    s = result[0, 0, 0] + result[1, 0, 0]
    return s / total if reduction == 'mean' else s


def _reference_iou_loss(pred, target, reduction='mean', eps=1e-07):
    pred_area = (pred[..., 2] - pred[..., 0]) * (pred[..., 3] - pred[..., 1])
    target_area = (target[..., 2] - target[..., 0]) * (target[..., 3] - target[..., 1])
    lt = jnp.maximum(pred[..., :2], target[..., :2])
    rb = jnp.minimum(pred[..., 2:], target[..., 2:])
    wh = jnp.maximum(rb - lt, 0.0)
    inter = wh[..., 0] * wh[..., 1]
    union = pred_area + target_area - inter
    iou = inter / (union + eps)
    loss = 1.0 - iou
    if reduction == 'mean':
        return loss.mean()
    if reduction == 'sum':
        return loss.sum()
    return loss


if __name__ == "__main__":
    key = jax.random.PRNGKey(0)

    def make_boxes(k, B, N):
        k1, k2, k3, k4 = jax.random.split(k, 4)
        p_xy = jax.random.uniform(k1, (B, N, 2), minval=0.0, maxval=10.0)
        p_wh = jax.random.uniform(k2, (B, N, 2), minval=0.5, maxval=5.0)
        t_xy = jax.random.uniform(k3, (B, N, 2), minval=0.0, maxval=10.0)
        t_wh = jax.random.uniform(k4, (B, N, 2), minval=0.5, maxval=5.0)
        pred = jnp.concatenate([p_xy, p_xy + p_wh], axis=-1).astype(jnp.float32)
        target = jnp.concatenate([t_xy, t_xy + t_wh], axis=-1).astype(jnp.float32)
        return pred, target

    k_a, k_b = jax.random.split(key)
    # (2, 8) exercises the padded-tail fallback; (2, 64) exercises the
    # pad-free (free-reshape) fast path.
    for kk, (B, N) in ((k_a, (2, 8)), (k_b, (2, 64))):
        pred, target = make_boxes(kk, B, N)
        for reduction in ('mean', 'sum', 'none'):
            out = jax.block_until_ready(iou_loss(pred, target, reduction=reduction))
            ref = _reference_iou_loss(pred, target, reduction=reduction)
            assert out.shape == ref.shape, (B, N, reduction, out.shape, ref.shape)
            assert jnp.allclose(out, ref, atol=1e-5, rtol=1e-5), (B, N, reduction, out, ref)

    print("KERNEL_OK")
</pallas_src>

<mosaic_0001>
module attributes {stable_mosaic.version = 11 : i64} {
  func.func @kernel(%arg0: i32, %arg1: i32, %arg2: memref<1x128xf32, #tpu.memory_space<vmem>>, %arg3: memref<1x128xf32, #tpu.memory_space<vmem>>, %arg4: memref<1x8x128xf32, #tpu.memory_space<vmem>>) attributes {dimension_semantics = [#tpu.dimension_semantics<parallel>, #tpu.dimension_semantics<arbitrary>], iteration_bounds = array<i64: 2, 1>, scalar_prefetch = 0 : i64, scratch_operands = 0 : i64, tpu.core_type = #tpu.core_type<tc>, window_params = [{transform_indices = @transform_0, window_bounds = array<i64: 1, 128>}, {transform_indices = @transform_1, window_bounds = array<i64: 1, 128>}, {transform_indices = @transform_2, window_bounds = array<i64: 1, 8, 128>}]} {
    %c0 = arith.constant 0 : index
    %c0_0 = arith.constant 0 : index
    %0 = vector.load %arg2[%c0, %c0_0] : memref<1x128xf32, #tpu.memory_space<vmem>>, vector<1x128xf32>
    %c0_1 = arith.constant 0 : index
    %c0_2 = arith.constant 0 : index
    %1 = vector.load %arg3[%c0_1, %c0_2] : memref<1x128xf32, #tpu.memory_space<vmem>>, vector<1x128xf32>
    %c126_i32 = arith.constant 126 : i32
    %2 = tpu.dynamic_rotate %0 by %c126_i32 dim 1 : vector<1x128xf32>, i32 -> vector<1x128xf32>
    %c126_i32_3 = arith.constant 126 : i32
    %3 = tpu.dynamic_rotate %1 by %c126_i32_3 dim 1 : vector<1x128xf32>, i32 -> vector<1x128xf32>
    %4 = arith.subf %2, %0 : vector<1x128xf32>
    %5 = arith.subf %3, %1 : vector<1x128xf32>
    %c127_i32 = arith.constant 127 : i32
    %6 = tpu.dynamic_rotate %4 by %c127_i32 dim 1 : vector<1x128xf32>, i32 -> vector<1x128xf32>
    %7 = arith.mulf %4, %6 : vector<1x128xf32>
    %c127_i32_4 = arith.constant 127 : i32
    %8 = tpu.dynamic_rotate %5 by %c127_i32_4 dim 1 : vector<1x128xf32>, i32 -> vector<1x128xf32>
    %9 = arith.mulf %5, %8 : vector<1x128xf32>
    %10 = arith.minimumf %2, %3 : vector<1x128xf32>
    %11 = arith.maximumf %0, %1 : vector<1x128xf32>
    %12 = arith.subf %10, %11 : vector<1x128xf32>
    %cst = arith.constant 0.000000e+00 : f32
    %13 = vector.broadcast %cst : f32 to vector<1x128xf32>
    %14 = arith.maximumf %12, %13 : vector<1x128xf32>
    %c127_i32_5 = arith.constant 127 : i32
    %15 = tpu.dynamic_rotate %14 by %c127_i32_5 dim 1 : vector<1x128xf32>, i32 -> vector<1x128xf32>
    %16 = arith.mulf %14, %15 : vector<1x128xf32>
    %17 = arith.addf %7, %9 : vector<1x128xf32>
    %18 = arith.subf %17, %16 : vector<1x128xf32>
    %cst_6 = arith.constant 1.000000e-07 : f32
    %19 = vector.broadcast %cst_6 : f32 to vector<1x128xf32>
    %20 = arith.addf %18, %19 : vector<1x128xf32>
    %21 = arith.divf %16, %20 : vector<1x128xf32>
    %cst_7 = arith.constant 1.000000e+00 : f32
    %22 = vector.broadcast %cst_7 : f32 to vector<1x128xf32>
    %23 = arith.subf %22, %21 : vector<1x128xf32>
    %c1_i32 = arith.constant 1 : i32
    %24 = arith.muli %arg0, %c1_i32 : i32
    %25 = arith.addi %24, %arg1 : i32
    %26 = tpu.iota {dimensions = array<i32: 0>} : vector<1x128xi32>
    %27 = tpu.iota {dimensions = array<i32: 1>} : vector<1x128xi32>
    %c1_i32_8 = arith.constant 1 : i32
    %28 = arith.muli %25, %c1_i32_8 : i32
    %29 = vector.broadcast %28 : i32 to vector<1x128xi32>
    %30 = arith.addi %29, %26 : vector<1x128xi32>
    %c128_i32 = arith.constant 128 : i32
    %31 = vector.broadcast %c128_i32 : i32 to vector<1x128xi32>
    %32 = arith.muli %30, %31 : vector<1x128xi32>
    %33 = arith.addi %32, %27 : vector<1x128xi32>
    %c3_i32 = arith.constant 3 : i32
    %34 = vector.broadcast %c3_i32 : i32 to vector<1x128xi32>
    %35 = arith.andi %27, %34 : vector<1x128xi32>
    %c0_i32 = arith.constant 0 : i32
    %36 = vector.broadcast %c0_i32 : i32 to vector<1x128xi32>
    %37 = arith.cmpi eq, %35, %36 : vector<1x128xi32>
    %c64_i32 = arith.constant 64 : i32
    %38 = vector.broadcast %c64_i32 : i32 to vector<1x128xi32>
    %39 = arith.cmpi slt, %33, %38 : vector<1x128xi32>
    %40 = arith.andi %37, %39 : vector<1x128xi1>
    %cst_9 = arith.constant 0.000000e+00 : f32
    %41 = vector.broadcast %cst_9 : f32 to vector<1x128xf32>
    %42 = arith.select %40, %23, %41 : vector<1x128xi1>, vector<1x128xf32>
    %c0_i32_10 = arith.constant 0 : i32
    %43 = arith.cmpi eq, %arg1, %c0_i32_10 : i32
    %44 = arith.extui %43 : i1 to i32
    %c0_i32_11 = arith.constant 0 : i32
    %45 = arith.cmpi ne, %44, %c0_i32_11 : i32
    scf.if %45 {
      %cst_19 = arith.constant 0.000000e+00 : f32
      %54 = vector.broadcast %cst_19 : f32 to vector<1x8x128xf32>
      %c0_20 = arith.constant 0 : index
      %c0_21 = arith.constant 0 : index
      %c0_22 = arith.constant 0 : index
      %55 = vector.load %arg4[%c0_20, %c0_21, %c0_22] : memref<1x8x128xf32, #tpu.memory_space<vmem>>, vector<1x8x128xf32>
      tpu.vector_store %arg4[%c0_20, %c0_21, %c0_22], %54 {strides = array<i32>} : memref<1x8x128xf32, #tpu.memory_space<vmem>>, vector<1x8x128xf32>,
    } else {
    }
    %c0_12 = arith.constant 0 : index
    %c0_13 = arith.constant 0 : index
    %c0_14 = arith.constant 0 : index
    %46 = vector.load %arg4[%c0_12, %c0_13, %c0_14] : memref<1x8x128xf32, #tpu.memory_space<vmem>>, vector<1x8x128xf32>
    %47 = vector.shape_cast %42 : vector<1x128xf32> to vector<1x1x128xf32>
    %cst_15 = arith.constant dense<0.000000e+00> : vector<1xf32>
    %48 = vector.multi_reduction <add>, %47, %cst_15 [1, 2] : vector<1x1x128xf32> to vector<1xf32>
    %49 = vector.shape_cast %48 : vector<1xf32> to vector<1x1x1xf32>
    %50 = vector.extract %49[0, 0, 0] : f32 from vector<1x1x1xf32>
    %51 = vector.broadcast %50 : f32 to vector<1x8x128xf32>
    %52 = arith.addf %46, %51 : vector<1x8x128xf32>
    %c0_16 = arith.constant 0 : index
    %c0_17 = arith.constant 0 : index
    %c0_18 = arith.constant 0 : index
    %53 = vector.load %arg4[%c0_16, %c0_17, %c0_18] : memref<1x8x128xf32, #tpu.memory_space<vmem>>, vector<1x8x128xf32>
    tpu.vector_store %arg4[%c0_16, %c0_17, %c0_18], %52 {strides = array<i32>} : memref<1x8x128xf32, #tpu.memory_space<vmem>>, vector<1x8x128xf32>,
    return
  }
  func.func @transform_0(%arg0: i32, %arg1: i32) -> (i32, i32) {
    %c1_i32 = arith.constant 1 : i32
    %0 = arith.muli %arg0, %c1_i32 : i32
    %1 = arith.addi %0, %arg1 : i32
    %c0_i32 = arith.constant 0 : i32
    %2 = arith.minsi %1, %c0_i32 : i32
    %c0_i32_0 = arith.constant 0 : i32
    %c0_i32_1 = arith.constant 0 : i32
    return %2, %c0_i32_0 : i32, i32
  }
  func.func @transform_1(%arg0: i32, %arg1: i32) -> (i32, i32) {
    %c1_i32 = arith.constant 1 : i32
    %0 = arith.muli %arg0, %c1_i32 : i32
    %1 = arith.addi %0, %arg1 : i32
    %c0_i32 = arith.constant 0 : i32
    %2 = arith.minsi %1, %c0_i32 : i32
    %c0_i32_0 = arith.constant 0 : i32
    %c0_i32_1 = arith.constant 0 : i32
    return %2, %c0_i32_0 : i32, i32
  }
  func.func @transform_2(%arg0: i32, %arg1: i32) -> (i32, i32, i32) {
    %c0_i32 = arith.constant 0 : i32
    %c0_i32_0 = arith.constant 0 : i32
    %c0_i32_1 = arith.constant 0 : i32
    return %arg0, %c0_i32, %c0_i32_0 : i32, i32, i32
  }
}

</mosaic_0001>

<llo_original>
// kernel: iou_loss.1
$region0: #{iou_loss.1}
  #allocation0 [shape = 'u32[]', space=smem, size = 0x4, offset = 0x4, fixed_abs, tag = 'smem constant byte address 0x4 - core index']
  #allocation1 [shape = 'u32[72,128]{1,0:T(1,128)}', space=vmem, size = 0x9000, scoped, tag = 'internal scratch']
  %s0 = inlined_call_operand.vmem [shape: f32[1,128], index: 0, kind: input, shape index: {}]
  %s1 = inlined_call_operand.vmem [shape: f32[1,128], index: 1, kind: input, shape index: {}]
  %s2 = inlined_call_operand.vmem [shape: f32[2,8,128], index: 2, kind: output, shape index: {}]
  %s3 = sld [smem:[#allocation0]]
  $region45: #{iou_loss.1} parent=0
    _
  %s5 = ssub.s32 1, %s3
  %s6 = scalar_select 0, %s5, %s3
  loop: start=0, step=1, limit=4
  $region2: #{iou_loss.1} parent=0 // loop_pre_header
    _
  $region3: #{iou_loss.1} parent=0 // loop_header
    %s8 = sphi 0, %s12
    %p9 = scmp.ge.s32.totalorder %s8, 4
    %s15 = sphi 0, %s27
    %s16 = sphi 0, %s23
    %s17 = sphi 0, %s15
    %s18 = sphi 0, %s16
    %s19 = sphi 0, %s17
    %s20 = sphi 0, %s18
    %s36 = sphi 0, %s38
    %s39 = sphi 0, %s36
    %s40 = sphi 0, %s39
    %s56 = sphi 0, %s40
    %s68 = sphi 0, %s70
    %s71 = sphi 0, %s68
    %s72 = sphi 0, %s71
    %s88 = sphi 0, %s72
    %s94 = sphi 0, %s96
    %s97 = sphi 0, %s94
    %s98 = sphi 0, %s97
    %s114 = sphi 0, %s98
  $region4: #{iou_loss.1} parent=0 // loop_header_branch
    %11 = sbr.rel (%p9) target = $region8
  $region5: #{iou_loss.1} parent=0 // loop_body
    %s13 = ssub.s32 %s8, 1
    %s14 = ssub.s32 %s8, 2
    %s21 = sadd.s32 1, %s16
    %p22 = scmp.ge.s32.totalorder %s21, 1
    %s23 = scalar_select %p22, 0, %s21
    %s24 = sadd.s32 1, %s15
    %s25 = scalar_select %p22, %s24, %s15
    %p26 = scmp.ge.s32.totalorder %s25, 2
    %s27 = scalar_select %p26, 0, %s25
    %s28 = sadd.s32 %s15, %s16
    %p29 = scmp.lt.s32.totalorder %s28, 0
    %s30 = scalar_select %p29, %s28, 0
    %s31 = sadd.s32 %s27, %s23
    %p32 = scmp.lt.s32.totalorder %s31, 0
    %s33 = scalar_select %p32, %s31, 0
    %s34 = ssub.s32 %s30, %s33
    %p35 = scmp.eq.s32.totalorder %s34, 0
    %s37 = sadd.s32 %s36, 1
    %s38 = scalar_select %p35, %s36, %s37
    %p41 = pneg %p35
    %p42 = scmp.eq.s32.totalorder %s8, 1
    %p43 = por %p41, %p42
    %p44 = scmp.ne.s32.totalorder %s36, %s39
    %p45 = scmp.eq.s32.totalorder %s8, 0
    %p46 = por %p44, %p45
    %p47 = scmp.ne.s32.totalorder %s36, %s39
    %p48 = scmp.eq.s32.totalorder %s13, 1
    %p49 = por %p47, %p48
    %p50 = scmp.ne.s32.totalorder %s39, %s40
    %p51 = scmp.eq.s32.totalorder %s13, 0
    %p52 = por %p50, %p51
    %p53 = scmp.ne.s32.totalorder %s39, %s40
    %p54 = scmp.eq.s32.totalorder %s14, 1
    %p55 = por %p53, %p54
    %p57 = scmp.ne.s32.totalorder %s40, %s56
    %p58 = scmp.eq.s32.totalorder %s14, 0
    %p59 = por %p57, %p58
    %s60 = sadd.s32 %s15, %s16
    %p61 = scmp.lt.s32.totalorder %s60, 0
    %s62 = scalar_select %p61, %s60, 0
    %s63 = sadd.s32 %s27, %s23
    %p64 = scmp.lt.s32.totalorder %s63, 0
    %s65 = scalar_select %p64, %s63, 0
    %s66 = ssub.s32 %s62, %s65
    %p67 = scmp.eq.s32.totalorder %s66, 0
    %s69 = sadd.s32 %s68, 1
    %s70 = scalar_select %p67, %s68, %s69
    %p73 = pneg %p67
    %p74 = scmp.eq.s32.totalorder %s8, 1
    %p75 = por %p73, %p74
    %p76 = scmp.ne.s32.totalorder %s68, %s71
    %p77 = scmp.eq.s32.totalorder %s8, 0
    %p78 = por %p76, %p77
    %p79 = scmp.ne.s32.totalorder %s68, %s71
    %p80 = scmp.eq.s32.totalorder %s13, 1
    %p81 = por %p79, %p80
    %p82 = scmp.ne.s32.totalorder %s71, %s72
    %p83 = scmp.eq.s32.totalorder %s13, 0
    %p84 = por %p82, %p83
    %p85 = scmp.ne.s32.totalorder %s71, %s72
    %p86 = scmp.eq.s32.totalorder %s14, 1
    %p87 = por %p85, %p86
    %p89 = scmp.ne.s32.totalorder %s72, %s88
    %p90 = scmp.eq.s32.totalorder %s14, 0
    %p91 = por %p89, %p90
    %s92 = ssub.s32 %s15, %s27
    %p93 = scmp.eq.s32.totalorder %s92, 0
    %s95 = sadd.s32 %s94, 1
    %s96 = scalar_select %p93, %s94, %s95
    %p99 = pneg %p93
    %p100 = scmp.eq.s32.totalorder %s8, 1
    %p101 = por %p99, %p100
    %p102 = scmp.ne.s32.totalorder %s94, %s97
    %p103 = scmp.eq.s32.totalorder %s8, 0
    %p104 = por %p102, %p103
    %p105 = scmp.ne.s32.totalorder %s94, %s97
    %p106 = scmp.eq.s32.totalorder %s13, 1
    %p107 = por %p105, %p106
    %p108 = scmp.ne.s32.totalorder %s97, %s98
    %p109 = scmp.eq.s32.totalorder %s13, 0
    %p110 = por %p108, %p109
    %p111 = scmp.ne.s32.totalorder %s97, %s98
    %p112 = scmp.eq.s32.totalorder %s14, 1
    %p113 = por %p111, %p112
    %p115 = scmp.ne.s32.totalorder %s98, %s114
    %p116 = scmp.eq.s32.totalorder %s14, 0
    %p117 = por %p115, %p116
    %p118 = scmp.le.s32.totalorder 1, %s8
    %p119 = scmp.lt.s32.totalorder %s8, 3
    %p120 = pnand %p118, %p119
    %p121 = pneg %p120
    // Predicated region
    $region9: #{iou_loss.1} parent=5 // pred_check
      _
    $region10: #{iou_loss.1} parent=5 // pred_check_branch
      %123 = sbr.rel (%p120) target = $region12
    $region11: #{iou_loss.1} parent=5 // pred_region
      %s124 = ssub.s32 %s8, 1
    $region12: #{iou_loss.1} parent=5 // pred_fallthru
      _
    %p125 = scmp.lt.s32.totalorder %s8, 2
    // Predicated region
    $region13: #{iou_loss.1} parent=5 // pred_check
      %p126 = pneg %p125
    $region14: #{iou_loss.1} parent=5 // pred_check_branch
      %128 = sbr.rel (%p126) target = $region16
    $region15: #{iou_loss.1} parent=5 // pred_region
      // Predicated region
      $region17: #{iou_loss.1} parent=15 // pred_check
        %p129 = pneg %p46
      $region18: #{iou_loss.1} parent=15 // pred_check_branch
        %131 = sbr.rel (%p129) target = $region20
      $region19: #{iou_loss.1} parent=15 // pred_region
        %s132 = sadd.s32 %s15, %s16
        %p133 = scmp.lt.s32.totalorder %s132, 0
        %s134 = scalar_select %p133, %s132, 0
        %p135 = scmp.lt.s32.totalorder %s134, 0
        %s136 = scalar_select %p135, %s134, 0
        %s137 = scalar_lea.vmem %s0, %s136
        %s138 = sadd.s32 %s15, %s16
        %p139 = scmp.lt.s32.totalorder %s138, 0
        %s140 = scalar_select %p139, %s138, 0
      $region20: #{iou_loss.1} parent=15 // pred_fallthru
        _
      // Predicated region
      $region21: #{iou_loss.1} parent=15 // pred_check
        %p141 = pneg %p78
      $region22: #{iou_loss.1} parent=15 // pred_check_branch
        %143 = sbr.rel (%p141) target = $region24
      $region23: #{iou_loss.1} parent=15 // pred_region
        %s144 = sadd.s32 %s15, %s16
        %p145 = scmp.lt.s32.totalorder %s144, 0
        %s146 = scalar_select %p145, %s144, 0
        %p147 = scmp.lt.s32.totalorder %s146, 0
        %s148 = scalar_select %p147, %s146, 0
        %s149 = scalar_lea.vmem %s1, %s148
        %s150 = sadd.s32 %s15, %s16
        %p151 = scmp.lt.s32.totalorder %s150, 0
        %s152 = scalar_select %p151, %s150, 0
      $region24: #{iou_loss.1} parent=15 // pred_fallthru
        _
    $region16: #{iou_loss.1} parent=5 // pred_fallthru
      _
    %p153 = scmp.le.s32.totalorder 1, %s8
    %p154 = scmp.lt.s32.totalorder %s8, 3
    %p155 = pnand %p153, %p154
    %p156 = pneg %p155
    // Predicated region
    $region25: #{iou_loss.1} parent=5 // pred_check
      _
    $region26: #{iou_loss.1} parent=5 // pred_check_branch
      %158 = sbr.rel (%p155) target = $region28
    $region27: #{iou_loss.1} parent=5 // pred_region
      %s159 = ssub.s32 %s8, 1
      %s160 = sadd.s32 %s17, %s18
      %p161 = scmp.lt.s32.totalorder %s160, 0
      %s162 = scalar_select %p161, %s160, 0
      %p163 = scmp.lt.s32.totalorder %s162, 0
      %s164 = scalar_select %p163, %s162, 0
      %s165 = scalar_lea.vmem %s0, %s164
      %p166 = pneg %p52
      %p167 = pneg %p49
      %s168 = sadd.s32 %s17, %s18
      %p169 = scmp.lt.s32.totalorder %s168, 0
      %s170 = scalar_select %p169, %s168, 0
      %p171 = scmp.lt.s32.totalorder %s170, 0
      %s172 = scalar_select %p171, %s170, 0
      %s173 = scalar_lea.vmem %s1, %s172
      %p174 = pneg %p84
      %p175 = pneg %p81
      %p176 = pneg %p110
      %p177 = pneg %p107
      %p178 = scmp.lt.s32.totalorder %s17, 1
      %s179 = scalar_select %p178, %s17, 1
      %s180 = smul.addr %s179, 8
      %s181 = scalar_lea.vmem %s2, %s180
      %s182 = sadd.s32 %s17, %s18
      %p183 = scmp.lt.s32.totalorder %s182, 0
      %s184 = scalar_select %p183, %s182, 0
      %p185 = scmp.lt.s32.totalorder %s184, 0
      %s186 = scalar_select %p185, %s184, 0
      %s187 = scalar_lea.vmem %s0, %s186
      %s188 = sadd.s32 %s17, %s18
      %p189 = scmp.lt.s32.totalorder %s188, 0
      %s190 = scalar_select %p189, %s188, 0
      %s191 = sadd.s32 %s17, %s18
      %p192 = scmp.lt.s32.totalorder %s191, 0
      %s193 = scalar_select %p192, %s191, 0
      %p194 = scmp.lt.s32.totalorder %s193, 0
      %s195 = scalar_select %p194, %s193, 0
      %s196 = scalar_lea.vmem %s1, %s195
      %s197 = sadd.s32 %s17, %s18
      %p198 = scmp.lt.s32.totalorder %s197, 0
      %s199 = scalar_select %p198, %s197, 0
      %p200 = scmp.lt.s32.totalorder %s17, 1
      %s201 = scalar_select %p200, %s17, 1
      %s202 = smul.addr %s201, 8
      %s203 = scalar_lea.vmem %s2, %s202
      %v204 = vld [vmem:[%s187] sm:$0x1]
      %v205 = vld [vmem:[%s196] sm:$0x1]
      %206 = vrot.lane.b32.xlu0 %v204, 126
      %v207 = vpop.permute.xlu0 %206
      %208 = vrot.lane.b32.xlu0 %v205, 126
      %v209 = vpop.permute.xlu0 %208
      %v210 = vsub.f32 %v207, %v204
      %v211 = vsub.f32 %v209, %v205
      %212 = vrot.lane.b32.xlu0 %v210, 127
      %v213 = vpop.permute.xlu0 %212
      %v214 = vmul.f32 %v210, %v213
      %215 = vrot.lane.b32.xlu0 %v211, 127
      %v216 = vpop.permute.xlu0 %215
      %v217 = vmul.f32 %v211, %v216
      %v218 = vmin.f32 %v207, %v209
      %v219 = vmax.f32 %v204, %v205
      %v220 = vsub.f32 %v218, %v219
      %v221 = vmax.f32 %v220, 0.0
      %222 = vrot.lane.b32.xlu0 %v221, 127
      %v223 = vpop.permute.xlu0 %222
      %v224 = vmul.f32 %v221, %v223
      %v225 = vadd.f32 %v214, %v217
      %v226 = vsub.f32 %v225, %v224
      %v227 = vadd.f32 %v226, 1e-07
      %v228 = vrcp.pop %v227
      %v229 = vmul.f32 %v227, %v228
      %v230 = vsub.f32 1.0, %v229
      %v231 = vmul.f32 %v228, %v230
      %v232 = vadd.f32 %v228, %v231
      %vm233 = vweird.f32 %v227
      %vm234 = vweird.f32 %v228
      %vm235 = vmor %vm233, %vm234
      %v236 = vsel %vm235, %v228, %v232
      %v237 = vand.u32 2147483647, %v227
      %vm238 = vcmp.eq.f32.partialorder %v237, 8.507059e+37
      %v239 = vand.u32 %v227, 2147483648
      %v240 = vor.u32 1.1754944e-38, %v239
      %v241 = vsel %vm238, %v240, %v236
      %v242 = vmul.f32 %v224, %v241
      %v243 = vsub.f32 1.0, %v242
      %s244 = sadd.s32 %s17, %s18
      %v245 = vlaneseq
      %v246 = vshrl.u32 %v245, 7
      %v247 = vlaneseq
      %v248 = vand.u32 %v247, 127
      %v249 = vstv %s244
      %v250 = vadd.s32 %v249, %v246
      %v251 = vmul.u32 %v250, 128
      %v252 = vadd.s32 %v251, %v248
      %v253 = vand.u32 %v248, 3
      %vm254 = vcmp.eq.s32.totalorder %v253, 0
      %vm255 = vcmp.lt.s32.totalorder %v252, 64
      %vm256 = vmand %vm254, %vm255
      %v257 = vsel %vm256, %v243, 0.0
      %p258 = scmp.eq.s32.totalorder %s18, 0
      // Predicated region
      $region29: #{iou_loss.1} parent=27 // pred_check
        %p259 = pneg %p258
      $region30: #{iou_loss.1} parent=27 // pred_check_branch
        %261 = sbr.rel (%p259) target = $region32
      $region31: #{iou_loss.1} parent=27 // pred_region
        %262 = vst [vmem:[%s203] sm:$0xff] 0.0
      $region32: #{iou_loss.1} parent=27 // pred_fallthru
        _
      %v263 = vld [vmem:[%s203] sm:$0xff]
      %vm264 = vcmask 1040384
      %v265 = vsel %vm264, %v257, 0.0
      %266 = vadd.xlane.f32.xlu0 %v265
      %v267 = vpop.xlane.xlu0 %266
      %v268 = vrot.slane %v267, 4
      %v269 = vadd.f32 %v267, %v268
      %v270 = vrot.slane %v269, 2
      %v271 = vadd.f32 %v269, %v270
      %v272 = vrot.slane %v271, 1
      %v273 = vadd.f32 %v271, %v272
      %s274 = vtos %v273
      %v275 = vstv %s274
      %v276 = vadd.f32 %v263, %v275
      %277 = vst [vmem:[%s203] sm:$0xff] %v276
      %p278 = scmp.lt.s32.totalorder %s17, 1
      %s279 = scalar_select %p278, %s17, 1
      %s280 = smul.addr %s279, 8
      %s281 = scalar_lea.vmem %s2, %s280
      // Predicated region
      $region33: #{iou_loss.1} parent=27 // pred_check
        %p282 = pneg %p107
      $region34: #{iou_loss.1} parent=27 // pred_check_branch
        %284 = sbr.rel (%p282) target = $region36
      $region35: #{iou_loss.1} parent=27 // pred_region
        _
      $region36: #{iou_loss.1} parent=27 // pred_fallthru
        _
    $region28: #{iou_loss.1} parent=5 // pred_fallthru
      _
    %p285 = scmp.le.s32.totalorder 2, %s8
    // Predicated region
    $region37: #{iou_loss.1} parent=5 // pred_check
      %p286 = pneg %p285
    $region38: #{iou_loss.1} parent=5 // pred_check_branch
      %288 = sbr.rel (%p286) target = $region40
    $region39: #{iou_loss.1} parent=5 // pred_region
      %s289 = ssub.s32 %s8, 2
      // Predicated region
      $region41: #{iou_loss.1} parent=39 // pred_check
        %p290 = pneg %p113
      $region42: #{iou_loss.1} parent=39 // pred_check_branch
        %292 = sbr.rel (%p290) target = $region44
      $region43: #{iou_loss.1} parent=39 // pred_region
        %p293 = scmp.lt.s32.totalorder %s19, 1
        %s294 = scalar_select %p293, %s19, 1
        %s295 = smul.addr %s294, 8
        %s296 = scalar_lea.vmem %s2, %s295
      $region44: #{iou_loss.1} parent=39 // pred_fallthru
        _
    $region40: #{iou_loss.1} parent=5 // pred_fallthru
      _
  $region6: #{iou_loss.1} parent=0 // loop_footer
    %s12 = sadd.s32 1, %s8
  $region7: #{iou_loss.1} parent=0 // loop_footer_branch
    %7 = sbr.rel target = $region3
  $region8: #{iou_loss.1} parent=0 // loop_exit
    _

</llo_original>
